<compile_context>
chip_gen: v7x
topology: tpu7x:2x2x1
jax: 0.10.0
libtpu: 0.0.40
codegen_flags: <defaults>
</compile_context>

<pallas_src>
import jax
import jax.numpy as jnp
from jax import lax
from jax.experimental import pallas as pl
from jax.experimental.pallas import tpu as pltpu

INPUT_SIZE = 50     # window_size
HIDDEN_SIZE = 64
OUTPUT_SIZE = 1

K_PAD = 64          # contraction dim padded to a sublane/MXU-friendly multiple
TILE_B_MAX = 1024   # batch tile size (rows per grid step)


def _round_up(n, m):
    return ((n + m - 1) // m) * m


def mlp_kernel(x_ref, w1_ref, b1_ref, w2_ref, b2_ref, o_ref):
    # x_ref : (TILE_B, K_PAD)   bf16   (batch tile)
    # w1_ref: (K_PAD, HIDDEN)   bf16   (VMEM resident)
    # b1_ref: (1, HIDDEN)       f32
    # w2_ref: (1, HIDDEN)       f32
    # b2_ref: (1, 1)            f32
    # o_ref : (1, TILE_B)       f32    (lane-dense: batch on the lane axis)
    h = jnp.dot(x_ref[...], w1_ref[...],
                preferred_element_type=jnp.float32)          # (TILE_B, H) MXU, bf16 in / f32 acc
    h = jnp.maximum(h + b1_ref[...], 0.0)                    # bias + ReLU in f32 (VPU)
    # fc2 (out_features == 1): contract HIDDEN against HIDDEN so the result is
    # produced directly as a lane-dense (1, TILE_B) row -> unmasked stores.
    y = lax.dot_general(w2_ref[...], h, (((1,), (1,)), ((), ())),
                        preferred_element_type=jnp.float32)   # (1, TILE_B)
    o_ref[...] = (y + b2_ref[...]).astype(o_ref.dtype)


def prepare_params(w1, b1, w2, b2):
    """One-time conversion from PyTorch nn.Linear layout to kernel layout.
    w1: (HIDDEN, INPUT), b1: (HIDDEN,), w2: (OUTPUT, HIDDEN), b2: (OUTPUT,).
    Do NOT call this per forward pass."""
    w1_t = jnp.zeros((K_PAD, HIDDEN_SIZE), jnp.float32).at[:INPUT_SIZE, :].set(w1.T)
    w1_t = w1_t.astype(jnp.bfloat16)                    # (K_PAD, HIDDEN) bf16
    b1_r = b1.reshape(1, HIDDEN_SIZE).astype(jnp.float32)
    w2_r = w2.reshape(1, HIDDEN_SIZE).astype(jnp.float32)
    b2_r = b2.reshape(1, 1).astype(jnp.float32)
    return w1_t, b1_r, w2_r, b2_r


@jax.jit
def mlp_forward(x, params):
    """x: (B, INPUT_SIZE) f32; params: output of prepare_params(). Returns (B, 1) f32."""
    w1_t, b1_r, w2_r, b2_r = params
    B = x.shape[0]
    tile_b = min(TILE_B_MAX, _round_up(B, 8))
    b_pad = _round_up(B, tile_b)

    # Single fused XLA op: pad batch + contraction dim and cast to bf16.
    x_p = jnp.pad(x, ((0, b_pad - B), (0, K_PAD - INPUT_SIZE))).astype(jnp.bfloat16)

    out = pl.pallas_call(
        mlp_kernel,
        out_shape=jax.ShapeDtypeStruct((1, b_pad), jnp.float32),
        grid=(b_pad // tile_b,),
        in_specs=[
            pl.BlockSpec((tile_b, K_PAD), lambda i: (i, 0)),        # x: tiled over batch
            pl.BlockSpec((K_PAD, HIDDEN_SIZE), lambda i: (0, 0)),   # W1: resident
            pl.BlockSpec((1, HIDDEN_SIZE), lambda i: (0, 0)),       # b1: resident
            pl.BlockSpec((1, HIDDEN_SIZE), lambda i: (0, 0)),       # w2 row: resident
            pl.BlockSpec((1, 1), lambda i: (0, 0)),                 # b2: resident
        ],
        out_specs=pl.BlockSpec((1, tile_b), lambda i: (0, i)),      # lane-dense output slab
        compiler_params=pltpu.CompilerParams(
            dimension_semantics=("parallel",)),                     # v7x: 2 TCs over batch
    )(x_p, w1_t, b1_r, w2_r, b2_r)

    # (1, b_pad) lane-dense slab -> module's (B, 1) output.
    return out[0, :B].reshape(B, OUTPUT_SIZE)


def init_params(key):
    """PyTorch nn.Linear default init: U[-1/sqrt(fan_in), 1/sqrt(fan_in)]."""
    k1, k2, k3, k4 = jax.random.split(key, 4)
    bound1 = 1.0 / jnp.sqrt(INPUT_SIZE)
    bound2 = 1.0 / jnp.sqrt(HIDDEN_SIZE)
    w1 = jax.random.uniform(k1, (HIDDEN_SIZE, INPUT_SIZE), jnp.float32, -bound1, bound1)
    b1 = jax.random.uniform(k2, (HIDDEN_SIZE,), jnp.float32, -bound1, bound1)
    w2 = jax.random.uniform(k3, (OUTPUT_SIZE, HIDDEN_SIZE), jnp.float32, -bound2, bound2)
    b2 = jax.random.uniform(k4, (OUTPUT_SIZE,), jnp.float32, -bound2, bound2)
    return w1, b1, w2, b2


def _reference_mixed(x, w1, b1, w2, b2):
    """Same mixed precision as the kernel: bf16 operands for fc1, f32 accumulate/elementwise."""
    h = jnp.dot(x.astype(jnp.bfloat16), w1.T.astype(jnp.bfloat16),
                preferred_element_type=jnp.float32) + b1
    h = jnp.maximum(h, 0.0)
    return jnp.dot(h, w2.T.astype(jnp.float32),
                   preferred_element_type=jnp.float32) + b2


if __name__ == "__main__":
    key = jax.random.PRNGKey(0)
    k_x, k_x2, k_p = jax.random.split(key, 3)

    w1, b1, w2, b2 = init_params(k_p)
    params = prepare_params(w1, b1, w2, b2)   # one-time layout prep (hoisted out of forward)

    # Small-shape run (single grid step).
    B = 8
    x = jax.random.normal(k_x, (B, INPUT_SIZE), jnp.float32)
    out = jax.block_until_ready(mlp_forward(x, params))
    assert out.shape == (B, OUTPUT_SIZE)

    ref = _reference_mixed(x, w1, b1, w2, b2)
    ref32 = jnp.maximum(x @ w1.T + b1, 0.0) @ w2.T + b2
    assert jnp.allclose(out, ref, atol=2e-3, rtol=2e-3)      # matches mixed-precision reference
    assert jnp.allclose(out, ref32, atol=5e-2, rtol=5e-2)    # close to full-f32 PyTorch forward

    # Multi-tile run (exercises batch grid, double buffering and tail padding).
    B2 = 2100
    x2 = jax.random.normal(k_x2, (B2, INPUT_SIZE), jnp.float32)
    out2 = jax.block_until_ready(mlp_forward(x2, params))
    ref2 = _reference_mixed(x2, w1, b1, w2, b2)
    assert out2.shape == (B2, OUTPUT_SIZE)
    assert jnp.allclose(out2, ref2, atol=2e-3, rtol=2e-3)

    print("KERNEL_OK")
</pallas_src>

<mosaic_0001>
module attributes {stable_mosaic.version = 11 : i64} {
  func.func @mlp_kernel(%arg0: i32, %arg1: memref<8x64xbf16, #tpu.memory_space<vmem>>, %arg2: memref<64x64xbf16, #tpu.memory_space<vmem>>, %arg3: memref<1x64xf32, #tpu.memory_space<vmem>>, %arg4: memref<1x64xf32, #tpu.memory_space<vmem>>, %arg5: memref<1x1xf32, #tpu.memory_space<vmem>>, %arg6: memref<1x8xf32, #tpu.memory_space<vmem>>) attributes {dimension_semantics = [#tpu.dimension_semantics<parallel>], iteration_bounds = array<i64: 1>, scalar_prefetch = 0 : i64, scratch_operands = 0 : i64, tpu.core_type = #tpu.core_type<tc>, window_params = [{transform_indices = @transform_0, window_bounds = array<i64: 8, 64>}, {pipeline_mode = #tpu.pipeline_mode<synchronous>, transform_indices = @transform_1, window_bounds = array<i64: 64, 64>}, {pipeline_mode = #tpu.pipeline_mode<synchronous>, transform_indices = @transform_2, window_bounds = array<i64: 1, 64>}, {pipeline_mode = #tpu.pipeline_mode<synchronous>, transform_indices = @transform_3, window_bounds = array<i64: 1, 64>}, {pipeline_mode = #tpu.pipeline_mode<synchronous>, transform_indices = @transform_4, window_bounds = array<i64: 1, 1>}, {transform_indices = @transform_5, window_bounds = array<i64: 1, 8>}]} {
    %c0 = arith.constant 0 : index
    %c0_0 = arith.constant 0 : index
    %0 = vector.load %arg1[%c0, %c0_0] : memref<8x64xbf16, #tpu.memory_space<vmem>>, vector<8x64xbf16>
    %c0_1 = arith.constant 0 : index
    %c0_2 = arith.constant 0 : index
    %1 = vector.load %arg2[%c0_1, %c0_2] : memref<64x64xbf16, #tpu.memory_space<vmem>>, vector<64x64xbf16>
    %cst = arith.constant dense<0.000000e+00> : vector<8x64xf32>
    %2 = tpu.matmul %0, %1, %cst {dimension_numbers = #tpu.dot_dimension_numbers<[1], [0], [0], [1], [0, 0, 1, 1], [], []>} : vector<8x64xbf16>, vector<64x64xbf16>, vector<8x64xf32> -> vector<8x64xf32>
    %c0_3 = arith.constant 0 : index
    %c0_4 = arith.constant 0 : index
    %3 = vector.load %arg3[%c0_3, %c0_4] : memref<1x64xf32, #tpu.memory_space<vmem>>, vector<1x64xf32>
    %4 = vector.broadcast %3 : vector<1x64xf32> to vector<8x64xf32>
    %5 = arith.addf %2, %4 : vector<8x64xf32>
    %cst_5 = arith.constant 0.000000e+00 : f32
    %6 = vector.broadcast %cst_5 : f32 to vector<8x64xf32>
    %7 = arith.maximumf %5, %6 : vector<8x64xf32>
    %c0_6 = arith.constant 0 : index
    %c0_7 = arith.constant 0 : index
    %8 = vector.load %arg4[%c0_6, %c0_7] : memref<1x64xf32, #tpu.memory_space<vmem>>, vector<1x64xf32>
    %cst_8 = arith.constant dense<0.000000e+00> : vector<1x8xf32>
    %9 = tpu.matmul %8, %7, %cst_8 {dimension_numbers = #tpu.dot_dimension_numbers<[1], [1], [0], [0], [0, 0, 1, 0], [], []>} : vector<1x64xf32>, vector<8x64xf32>, vector<1x8xf32> -> vector<1x8xf32>
    %c0_9 = arith.constant 0 : index
    %c0_10 = arith.constant 0 : index
    %10 = vector.load %arg5[%c0_9, %c0_10] : memref<1x1xf32, #tpu.memory_space<vmem>>, vector<1x1xf32>
    %11 = vector.broadcast %10 : vector<1x1xf32> to vector<1x8xf32>
    %12 = arith.addf %9, %11 : vector<1x8xf32>
    %c0_11 = arith.constant 0 : index
    %c0_12 = arith.constant 0 : index
    %13 = vector.load %arg6[%c0_11, %c0_12] : memref<1x8xf32, #tpu.memory_space<vmem>>, vector<1x8xf32>
    tpu.vector_store %arg6[%c0_11, %c0_12], %12 {strides = array<i32>} : memref<1x8xf32, #tpu.memory_space<vmem>>, vector<1x8xf32>,
    return
  }
  func.func @transform_0(%arg0: i32) -> (i32, i32) {
    %c0_i32 = arith.constant 0 : i32
    %c0_i32_0 = arith.constant 0 : i32
    return %arg0, %c0_i32 : i32, i32
  }
  func.func @transform_1(%arg0: i32) -> (i32, i32) {
    %c0_i32 = arith.constant 0 : i32
    %c0_i32_0 = arith.constant 0 : i32
    %c0_i32_1 = arith.constant 0 : i32
    return %c0_i32, %c0_i32_0 : i32, i32
  }
  func.func @transform_2(%arg0: i32) -> (i32, i32) {
    %c0_i32 = arith.constant 0 : i32
    %c0_i32_0 = arith.constant 0 : i32
    %c0_i32_1 = arith.constant 0 : i32
    return %c0_i32, %c0_i32_0 : i32, i32
  }
  func.func @transform_3(%arg0: i32) -> (i32, i32) {
    %c0_i32 = arith.constant 0 : i32
    %c0_i32_0 = arith.constant 0 : i32
    %c0_i32_1 = arith.constant 0 : i32
    return %c0_i32, %c0_i32_0 : i32, i32
  }
  func.func @transform_4(%arg0: i32) -> (i32, i32) {
    %c0_i32 = arith.constant 0 : i32
    %c0_i32_0 = arith.constant 0 : i32
    %c0_i32_1 = arith.constant 0 : i32
    return %c0_i32, %c0_i32_0 : i32, i32
  }
  func.func @transform_5(%arg0: i32) -> (i32, i32) {
    %c0_i32 = arith.constant 0 : i32
    %c0_i32_0 = arith.constant 0 : i32
    return %c0_i32, %arg0 : i32, i32
  }
}

</mosaic_0001>

<llo_original>
// kernel: mlp_forward.1
$region0: #{mlp_forward.1}
  #allocation0 [shape = 'u32[]', space=smem, size = 0x4, offset = 0x4, fixed_abs, tag = 'smem constant byte address 0x4 - core index']
  #allocation1 [shape = 'u32[144,128]{1,0:T(1,128)}', space=vmem, size = 0x12000, scoped, tag = 'internal scratch']
  #allocation2 [shape = 'f32[1,1]{1,0:T(1,128)S(1)}', space=vmem, size = 0x200, scoped, tag = 'scoped memory for mlp_forward.1']
  %s0 = inlined_call_operand.vmem [shape: bf16[8,64], index: 0, kind: input, shape index: {}]
  %s1 = inlined_call_operand.vmem [shape: bf16[64,64], index: 1, kind: input, shape index: {}]
  %s2 = inlined_call_operand.hbm [shape: f32[1,64], index: 2, kind: input, shape index: {}]
  %s3 = inlined_call_operand.hbm [shape: f32[1,64], index: 3, kind: input, shape index: {}]
  %s4 = inlined_call_operand.<no memory space> [shape: f32[1,1], index: 4, kind: input, shape index: {}]
  %s5 = inlined_call_operand.hbm [shape: f32[1,8], index: 5, kind: output, shape index: {}]
  %s6 = sld [smem:[#allocation0]]
  $region38: #{mlp_forward.1} parent=0
    _
  %s8 = ssub.s32 1, %s6
  %s9 = scalar_select 0, %s8, %s6
  %v10 = vstv %s4
  %11 = vst [vmem:[#allocation2] sm:$0x1] %v10
  $region1: #{mlp_forward.1} parent=0
    #allocation3 [shape = 'u8[512]{0}', space=vmem, size = 0x400, scoped, tag = 'input window, operand 2, single buffered']
    #allocation4 [shape = 's32[1]{0}', space=sflag, size = 0x4, scoped, tag = 'scoped memory for mlp_forward.1']
    #allocation5 [shape = 's32[1]{0}', space=sflag, size = 0x4, scoped, tag = 'scoped memory for mlp_forward.1']
    #allocation6 [shape = 'u8[512]{0}', space=vmem, size = 0x400, scoped, tag = 'input window, operand 3, single buffered']
    #allocation7 [shape = 's32[1]{0}', space=sflag, size = 0x4, scoped, tag = 'scoped memory for mlp_forward.1']
    #allocation8 [shape = 'u8[512]{0}', space=vmem, size = 0x400, scoped, tag = 'output window, operand 0, single buffered']
    %12 = vsyncpa [#allocation4], 0
    %13 = vsyncpa [#allocation7], 0
    %14 = vsyncpa [#allocation5], 0
    // Predicated region
    $region2: #{mlp_forward.1} parent=1 // pred_check
      _
    $region3: #{mlp_forward.1} parent=1 // pred_check_branch
      %16 = sbr.rel (0) target = $region5
    $region4: #{mlp_forward.1} parent=1 // pred_region
      _
    $region5: #{mlp_forward.1} parent=1 // pred_fallthru
      _
    // Predicated region
    $region6: #{mlp_forward.1} parent=1 // pred_check
      _
    $region7: #{mlp_forward.1} parent=1 // pred_check_branch
      %18 = sbr.rel (0) target = $region9
    $region8: #{mlp_forward.1} parent=1 // pred_region
      _
    $region9: #{mlp_forward.1} parent=1 // pred_fallthru
      _
    // Predicated region
    $region10: #{mlp_forward.1} parent=1 // pred_check
      _
    $region11: #{mlp_forward.1} parent=1 // pred_check_branch
      %20 = sbr.rel (0) target = $region13
    $region12: #{mlp_forward.1} parent=1 // pred_region
      %s22 = ssub.s32 16, 16
      %23 = vsyncadd [#allocation4], %s22
      %s25 = sshll.u32 [#allocation3], 4
      %s26 = int_to_ptr.vmem [resolvable:$true] %s25
      %28 = dma.hbm_to_vmem [thread:$0]  %s2, 16, %s26, [#allocation4]
    $region13: #{mlp_forward.1} parent=1 // pred_fallthru
      _
    // Predicated region
    $region14: #{mlp_forward.1} parent=1 // pred_check
      _
    $region15: #{mlp_forward.1} parent=1 // pred_check_branch
      %30 = sbr.rel (0) target = $region17
    $region16: #{mlp_forward.1} parent=1 // pred_region
      %s32 = ssub.s32 16, 16
      %33 = vsyncadd [#allocation7], %s32
      %s35 = sshll.u32 [#allocation6], 4
      %s36 = int_to_ptr.vmem [resolvable:$true] %s35
      %38 = dma.hbm_to_vmem [thread:$0]  %s3, 16, %s36, [#allocation7]
    $region17: #{mlp_forward.1} parent=1 // pred_fallthru
      _
    // Predicated region
    $region18: #{mlp_forward.1} parent=1 // pred_check
      _
    $region19: #{mlp_forward.1} parent=1 // pred_check_branch
      %40 = sbr.rel (0) target = $region21
    $region20: #{mlp_forward.1} parent=1 // pred_region
      _
    $region21: #{mlp_forward.1} parent=1 // pred_fallthru
      _
    // Predicated region
    $region22: #{mlp_forward.1} parent=1 // pred_check
      _
    $region23: #{mlp_forward.1} parent=1 // pred_check_branch
      %42 = sbr.rel (0) target = $region25
    $region24: #{mlp_forward.1} parent=1 // pred_region
      %43 = dma.done [#allocation4], 16
    $region25: #{mlp_forward.1} parent=1 // pred_fallthru
      _
    // Predicated region
    $region26: #{mlp_forward.1} parent=1 // pred_check
      _
    $region27: #{mlp_forward.1} parent=1 // pred_check_branch
      %45 = sbr.rel (0) target = $region29
    $region28: #{mlp_forward.1} parent=1 // pred_region
      %46 = dma.done [#allocation7], 16
    $region29: #{mlp_forward.1} parent=1 // pred_fallthru
      _
    %v48 = vld [vmem:[%s0] sm:$0xf]
    %v49 = vld [vmem:[%s1] sm:$0xf]
    %v50 = vld [vmem:[%s1 + $0x4] sm:$0xf]
    %v51 = vld [vmem:[%s1 + $0x8] sm:$0xf]
    %v52 = vld [vmem:[%s1 + $0xc] sm:$0xf]
    %v53 = vld [vmem:[%s1 + $0x10] sm:$0xf]
    %v54 = vld [vmem:[%s1 + $0x14] sm:$0xf]
    %v55 = vld [vmem:[%s1 + $0x18] sm:$0xf]
    %v56 = vld [vmem:[%s1 + $0x1c] sm:$0xf]
    %v57 = vld [vmem:[#allocation3] sm:$0x1]
    %v59 = vlaneseq
    %v60 = vshrl.u32 %v59, 7
    %v61 = vsub.s32 0, %v60
    %v62 = vrot.slane %v57, %v61
    %v72 = vunpack.c.l.b16 %v49
    %v73 = vunpack.c.l.b16 %v50
    %v74 = vunpack.c.l.b16 %v51
    %v75 = vunpack.c.l.b16 %v52
    %v76 = vunpack.c.l.b16 %v53
    %v77 = vunpack.c.l.b16 %v54
    %v78 = vunpack.c.l.b16 %v55
    %v79 = vunpack.c.l.b16 %v56
    %v80 = vpack.c.b16 %v73, %v72
    %v81 = vpack.c.b16 %v75, %v74
    %v82 = vpack.c.b16 %v77, %v76
    %v83 = vpack.c.b16 %v79, %v78
    %vm88 = vcmask 523264
    %v90 = vsel %vm88, %v48, 0
    %92 = vmatprep.subr.bf16.mxu0 0
    %93 = vmatpush1.bf16.msra.mxu0 %v80
    %94 = vmatprep.subr.bf16.mxu0 0
    %95 = vmatpush1.bf16.msra.mxu0 %v81
    %96 = vmatprep.subr.bf16.mxu0 0
    %97 = vmatpush1.bf16.msra.mxu0 %v82
    %98 = vmatprep.subr.bf16.mxu0 0
    %99 = vmatpush1.bf16.msra.mxu0 %v83
    %100 = vmatprep.subr.bf16.mxu0 0
    %101 = vmatpush1.bf16.msra.mxu0 0
    %102 = vmatprep.subr.bf16.mxu0 0
    %103 = vmatpush1.bf16.msra.mxu0 0
    %104 = vmatprep.subr.bf16.mxu0 0
    %105 = vmatpush1.bf16.msra.mxu0 0
    %106 = vmatprep.subr.bf16.mxu0 0
    %107 = vmatpush1.bf16.msra.mxu0 0
    %108 = vmatprep.subr.bf16.mxu0 0
    %109 = vmatpush1.bf16.msra.mxu0 0
    %110 = vmatprep.subr.bf16.mxu0 0
    %111 = vmatpush1.bf16.msra.mxu0 0
    %112 = vmatprep.subr.bf16.mxu0 0
    %113 = vmatpush1.bf16.msra.mxu0 0
    %114 = vmatprep.subr.bf16.mxu0 0
    %115 = vmatpush1.bf16.msra.mxu0 0
    %116 = vmatprep.subr.bf16.mxu0 0
    %117 = vmatpush1.bf16.msra.mxu0 0
    %118 = vmatprep.subr.bf16.mxu0 0
    %119 = vmatpush1.bf16.msra.mxu0 0
    %120 = vmatprep.subr.bf16.mxu0 0
    %121 = vmatpush1.bf16.msra.mxu0 0
    %122 = vmatprep.subr.bf16.mxu0 0
    %123 = vmatpush1.bf16.msra.mxu0 0
    %124 = vmatprep.mubr.bf16.mxu0 0
    %125 = vmatmul.mubr.bf16.gmra.mrb[0].mxu0 %v90
    %v126 = vpop.f32.mrb[0].mxu0
    %v127 = vadd.f32 %v62, %v126
    %v128 = vpop.f32.mrb[0].mxu0
    %v129 = vpop.f32.mrb[0].mxu0
    %v130 = vpop.f32.mrb[0].mxu0
    %131 = vdwg.mxu0
    %v132 = vmax.f32 %v127, 0.0
    %v133 = vld [vmem:[#allocation6] sm:$0x1]
    %v134 = vld [vmem:[#allocation2] sm:$0x1]
    %136 = vset.pattern.permute.xlu0 0
    %137 = vperm.xlu0 %136, %v134
    %v138 = vpop.permute.xlu0 %137
    %v140 = vlaneseq
    %v141 = vshrl.u32 %v140, 7
    %v142 = vsub.s32 0, %v141
    %v143 = vrot.slane %v138, %v142
    %v145 = vsel %vm88, %v133, 0
    %v148 = vsel %vm88, %v132, 0
    %150 = vmatprep.subr.mxu0 0.0
    %151 = vmatpush1.xpose.msra.mxu0 %v148
    %152 = vmatprep.subr.mxu0 0.0
    %153 = vmatpush1.xpose.msra.mxu0 0.0
    %154 = vmatprep.subr.mxu0 0.0
    %155 = vmatpush1.xpose.msra.mxu0 0.0
    %156 = vmatprep.subr.mxu0 0.0
    %157 = vmatpush1.xpose.msra.mxu0 0.0
    %158 = vmatprep.subr.mxu0 0.0
    %159 = vmatpush1.xpose.msra.mxu0 0.0
    %160 = vmatprep.subr.mxu0 0.0
    %161 = vmatpush1.xpose.msra.mxu0 0.0
    %162 = vmatprep.subr.mxu0 0.0
    %163 = vmatpush1.xpose.msra.mxu0 0.0
    %164 = vmatprep.subr.mxu0 0.0
    %165 = vmatpush1.xpose.msra.mxu0 0.0
    %166 = vmatprep.subr.mxu0 0.0
    %167 = vmatpush1.xpose.msra.mxu0 0.0
    %168 = vmatprep.subr.mxu0 0.0
    %169 = vmatpush1.xpose.msra.mxu0 0.0
    %170 = vmatprep.subr.mxu0 0.0
    %171 = vmatpush1.xpose.msra.mxu0 0.0
    %172 = vmatprep.subr.mxu0 0.0
    %173 = vmatpush1.xpose.msra.mxu0 0.0
    %174 = vmatprep.subr.mxu0 0.0
    %175 = vmatpush1.xpose.msra.mxu0 0.0
    %176 = vmatprep.subr.mxu0 0.0
    %177 = vmatpush1.xpose.msra.mxu0 0.0
    %178 = vmatprep.subr.mxu0 0.0
    %179 = vmatpush1.xpose.msra.mxu0 0.0
    %180 = vmatprep.subr.mxu0 0.0
    %181 = vmatpush1.xpose.msra.mxu0 0.0
    %182 = vmatprep.subr.mxu0 0.0
    %183 = vmatpush1.xpose.msra.mxu0 0.0
    %184 = vmatprep.subr.mxu0 0.0
    %185 = vmatpush1.xpose.msra.mxu0 0.0
    %186 = vmatprep.subr.mxu0 0.0
    %187 = vmatpush1.xpose.msra.mxu0 0.0
    %188 = vmatprep.subr.mxu0 0.0
    %189 = vmatpush1.xpose.msra.mxu0 0.0
    %190 = vmatprep.subr.mxu0 0.0
    %191 = vmatpush1.xpose.msra.mxu0 0.0
    %192 = vmatprep.subr.mxu0 0.0
    %193 = vmatpush1.xpose.msra.mxu0 0.0
    %194 = vmatprep.subr.mxu0 0.0
    %195 = vmatpush1.xpose.msra.mxu0 0.0
    %196 = vmatprep.subr.mxu0 0.0
    %197 = vmatpush1.xpose.msra.mxu0 0.0
    %198 = vmatprep.subr.mxu0 0.0
    %199 = vmatpush1.xpose.msra.mxu0 0.0
    %200 = vmatprep.subr.mxu0 0.0
    %201 = vmatpush1.xpose.msra.mxu0 0.0
    %202 = vmatprep.subr.mxu0 0.0
    %203 = vmatpush1.xpose.msra.mxu0 0.0
    %204 = vmatprep.subr.mxu0 0.0
    %205 = vmatpush1.xpose.msra.mxu0 0.0
    %206 = vmatprep.subr.mxu0 0.0
    %207 = vmatpush1.xpose.msra.mxu0 0.0
    %208 = vmatprep.subr.mxu0 0.0
    %209 = vmatpush1.xpose.msra.mxu0 0.0
    %210 = vmatprep.subr.mxu0 0.0
    %211 = vmatpush1.xpose.msra.mxu0 0.0
    %212 = vmatprep.subr.mxu0 0.0
    %213 = vmatpush1.xpose.msra.mxu0 0.0
    %214 = vmatprep.mubr.f32.mxu0 0.0
    %215 = vmatmul.mubr.f32.gmra.mrb[0].mxu0 %v145
    %v216 = vpop.f32.mrb[0].mxu0
    %v217 = vadd.f32 %v143, %v216
    %v218 = vpop.f32.mrb[0].mxu0
    %219 = vdwg.mxu0
    %vm220 = vcmask 57344
    %221 = vst.msk [vmem:[#allocation8] sm:$0x1] %vm220, %v217
    // Predicated region
    $region30: #{mlp_forward.1} parent=1 // pred_check
      _
    $region31: #{mlp_forward.1} parent=1 // pred_check_branch
      %223 = sbr.rel (0) target = $region33
    $region32: #{mlp_forward.1} parent=1 // pred_region
      %s225 = ssub.s32 16, 16
      %226 = vsyncadd [#allocation5], %s225
      %s228 = sshll.u32 [#allocation8], 4
      %s229 = int_to_ptr.vmem [resolvable:$true] %s228
      %231 = dma.vmem_to_hbm [thread:$0]  %s229, 16, %s5, [#allocation5]
    $region33: #{mlp_forward.1} parent=1 // pred_fallthru
      _
    // Predicated region
    $region34: #{mlp_forward.1} parent=1 // pred_check
      _
    $region35: #{mlp_forward.1} parent=1 // pred_check_branch
      %233 = sbr.rel (0) target = $region37
    $region36: #{mlp_forward.1} parent=1 // pred_region
      %234 = dma.done [#allocation5], 16
    $region37: #{mlp_forward.1} parent=1 // pred_fallthru
      _
    %235 = vsyncpa [#allocation4], 1
    %236 = vsyncpa [#allocation7], 1
    %237 = vsyncpa [#allocation5], 1

</llo_original>
